<compile_context>
chip_gen: v7x
topology: tpu7x:2x2x1
jax: 0.10.0
libtpu: 0.0.40
codegen_flags: <defaults>
</compile_context>

<pallas_src>
import functools

import jax
import jax.numpy as jnp
from jax import lax
from jax.experimental import pallas as pl
from jax.experimental.pallas import tpu as pltpu

ALPHA = 1.0
_LANE = 128


def _round_up(v, m):
    return (v + m - 1) // m * m


def _fdec_kernel(x_ref, w_ref, b_ref, ctm2_ref, c2_ref, q_ref, enc_ref, *,
                 n_clusters, alpha):
    # ---- encoder: one Linear layer (lane-dense padded to B_pad columns) ----
    x = x_ref[...]                                                        # (TN, D)
    enc = jnp.dot(x, w_ref[...], preferred_element_type=jnp.float32) + b_ref[...]
    enc_ref[...] = enc.astype(enc_ref.dtype)                              # (TN, Bp)

    # ---- DEC soft assignment ----
    # dist[n,k] = ||e_n||^2 + ||c_k||^2 - 2 e_n.c_k
    #   * ||c||^2 (c2) precomputed host-side (grid-invariant)
    #   * -2 folded into ctm2 = -2 * centers^T host-side
    e2 = jnp.sum(enc * enc, axis=1, keepdims=True)                        # (TN, 1)
    cross_m2 = jnp.dot(enc, ctm2_ref[...],
                       preferred_element_type=jnp.float32)                # (TN, Kp)
    dist = jnp.maximum(e2 + c2_ref[...] + cross_m2, 0.0)                  # clamp fp cancel

    if alpha != 1.0:
        dist = dist * (1.0 / alpha)

    # Student-t kernel: EUP-seeded reciprocal + one Newton step (full f32 accuracy,
    # fewer VALU ops than an exact divide).
    y = 1.0 + dist
    r = pl.reciprocal(y, approx=True)
    q = r * (2.0 - y * r)

    exponent = (alpha + 1.0) / 2.0
    if exponent != 1.0:  # alpha == 1.0 -> exponent 1.0, skip pow (matches torch exactly)
        q = q ** exponent

    # Zero out padded cluster columns so they don't pollute the row sum.
    col = lax.broadcasted_iota(jnp.int32, q.shape, 1)
    q = jnp.where(col < n_clusters, q, 0.0)

    # Exact row normalization (rows sum to 1).
    q = q * pl.reciprocal(jnp.sum(q, axis=1, keepdims=True), approx=False)
    q_ref[...] = q.astype(q_ref.dtype)


def functional_dec_forward(x, w_enc, b_enc, centers, *, alpha=ALPHA):
    """x:(N,D), w_enc:(D,B), b_enc:(B,), centers:(K,B) -> (q:(N,K), encoded:(N,B))."""
    N, D = x.shape
    B = w_enc.shape[1]
    K = centers.shape[0]
    Bp = _round_up(B, _LANE)
    Kp = _round_up(K, _LANE)
    f32 = jnp.float32

    # Host-side (glue) padding / preprocessing — done once, outside the grid loop.
    w_pad = jnp.zeros((D, Bp), f32).at[:, :B].set(w_enc.astype(f32))
    b_pad = jnp.zeros((1, Bp), f32).at[0, :B].set(b_enc.astype(f32))
    ctm2 = jnp.zeros((Bp, Kp), f32).at[:B, :K].set((-2.0 * centers.T).astype(f32))
    c2 = jnp.zeros((1, Kp), f32).at[0, :K].set(
        jnp.sum(centers.astype(f32) * centers.astype(f32), axis=1))

    # ---- tile over N so (double-buffered x) + weights + outputs fit a conservative
    #      ~24 MiB budget (safe for v7x's 64 MiB per-TC VMEM). ----
    weight_bytes = 4 * (D * Bp + Bp + Bp * Kp + Kp)

    def vmem_estimate(tn):
        return 2 * (tn * D * 4) + 2 * weight_bytes + 2 * tn * (Bp + Kp) * 4

    budget = 24 * 1024 * 1024
    tile_n = N if N <= 512 else 512
    if tile_n < N:
        tile_n = max(8, (tile_n // 8) * 8)
    while 8 < tile_n < N and vmem_estimate(tile_n) > budget:
        tile_n = max(8, (tile_n // 2 // 8) * 8)
    grid = (pl.cdiv(N, tile_n),)

    kernel = functools.partial(_fdec_kernel, n_clusters=K, alpha=alpha)

    cost = pl.CostEstimate(
        flops=2 * N * D * Bp + 2 * N * Bp * Kp + 8 * N * Kp,
        transcendentals=N * Kp,
        bytes_accessed=4 * (N * D + D * Bp + Bp * Kp + N * Bp + N * Kp),
    )

    q_pad, enc_pad = pl.pallas_call(
        kernel,
        out_shape=(
            jax.ShapeDtypeStruct((N, Kp), f32),
            jax.ShapeDtypeStruct((N, Bp), f32),
        ),
        grid=grid,
        in_specs=[
            pl.BlockSpec((tile_n, D), lambda i: (i, 0)),   # x: streamed per tile
            pl.BlockSpec((D, Bp), lambda i: (0, 0)),       # w: VMEM-resident
            pl.BlockSpec((1, Bp), lambda i: (0, 0)),       # b: VMEM-resident
            pl.BlockSpec((Bp, Kp), lambda i: (0, 0)),      # -2*centers^T: VMEM-resident
            pl.BlockSpec((1, Kp), lambda i: (0, 0)),       # ||c||^2: VMEM-resident
        ],
        out_specs=(
            pl.BlockSpec((tile_n, Kp), lambda i: (i, 0)),  # q (lane-dense, padded K)
            pl.BlockSpec((tile_n, Bp), lambda i: (i, 0)),  # enc (lane-dense, padded B)
        ),
        compiler_params=pltpu.CompilerParams(
            dimension_semantics=("parallel",),             # megacore shard on v7x
            vmem_limit_bytes=min(64 * 1024 * 1024,
                                 max(2 * vmem_estimate(tile_n), 8 * 1024 * 1024)),
        ),
        cost_estimate=cost,
    )(x.astype(f32), w_pad, b_pad, ctm2, c2)

    # Slice padded lanes back to the module's logical shapes.
    return q_pad[:, :K], enc_pad[:, :B]


def _reference_forward(x, w_enc, b_enc, centers, alpha=ALPHA):
    enc = x @ w_enc + b_enc[None, :]
    diff = enc[:, None, :] - centers[None, :, :]
    dist = jnp.sum(diff * diff, axis=2)
    q = 1.0 / (1.0 + dist / alpha)
    q = q ** ((alpha + 1.0) / 2.0)
    q = q / jnp.sum(q, axis=1, keepdims=True)
    return q, enc


if __name__ == "__main__":
    # Small shapes consistent with the module: one-layer encoder D -> bottleneck B,
    # DEC with K cluster centers of dim B.
    N, D, B, K = 8, 32, 16, 4

    key = jax.random.PRNGKey(0)
    kx, kw, kb, kc = jax.random.split(key, 4)

    x = jax.random.normal(kx, (N, D), dtype=jnp.float32)

    # Deterministic parameter init (synthetic; mirrors nn.Linear + torch.randn shapes).
    limit = 1.0 / jnp.sqrt(jnp.float32(D))
    w_enc = jax.random.uniform(kw, (D, B), minval=-limit, maxval=limit, dtype=jnp.float32)
    b_enc = jax.random.uniform(kb, (B,), minval=-limit, maxval=limit, dtype=jnp.float32)
    centers = jax.random.normal(kc, (K, B), dtype=jnp.float32)  # DEC cluster_centers ~ randn

    q, enc = jax.block_until_ready(functional_dec_forward(x, w_enc, b_enc, centers))

    q_ref, enc_ref = _reference_forward(x, w_enc, b_enc, centers)
    assert q.shape == (N, K) and enc.shape == (N, B), "output shape mismatch"
    assert jnp.allclose(enc, enc_ref, atol=1e-5, rtol=1e-5), "encoded mismatch"
    # q uses an EUP-seeded reciprocal (+1 Newton step); allow a slightly looser tol.
    assert jnp.allclose(q, q_ref, atol=1e-4, rtol=1e-4), "q mismatch"
    assert jnp.allclose(jnp.sum(q, axis=1), 1.0, atol=1e-5), "q rows must sum to 1"

    print("KERNEL_OK")
</pallas_src>

<mosaic_0001>
module attributes {stable_mosaic.version = 11 : i64} {
  func.func @_fdec_kernel(%arg0: i32, %arg1: memref<8x32xf32, #tpu.memory_space<vmem>>, %arg2: memref<32x128xf32, #tpu.memory_space<vmem>>, %arg3: memref<1x128xf32, #tpu.memory_space<vmem>>, %arg4: memref<128x128xf32, #tpu.memory_space<vmem>>, %arg5: memref<1x128xf32, #tpu.memory_space<vmem>>, %arg6: memref<8x128xf32, #tpu.memory_space<vmem>>, %arg7: memref<8x128xf32, #tpu.memory_space<vmem>>) attributes {dimension_semantics = [#tpu.dimension_semantics<parallel>], iteration_bounds = array<i64: 1>, scalar_prefetch = 0 : i64, scratch_operands = 0 : i64, tpu.core_type = #tpu.core_type<tc>, window_params = [{transform_indices = @transform_0, window_bounds = array<i64: 8, 32>}, {pipeline_mode = #tpu.pipeline_mode<synchronous>, transform_indices = @transform_1, window_bounds = array<i64: 32, 128>}, {pipeline_mode = #tpu.pipeline_mode<synchronous>, transform_indices = @transform_2, window_bounds = array<i64: 1, 128>}, {pipeline_mode = #tpu.pipeline_mode<synchronous>, transform_indices = @transform_3, window_bounds = array<i64: 128, 128>}, {pipeline_mode = #tpu.pipeline_mode<synchronous>, transform_indices = @transform_4, window_bounds = array<i64: 1, 128>}, {transform_indices = @transform_5, window_bounds = array<i64: 8, 128>}, {transform_indices = @transform_6, window_bounds = array<i64: 8, 128>}]} {
    %c0 = arith.constant 0 : index
    %c0_0 = arith.constant 0 : index
    %0 = vector.load %arg1[%c0, %c0_0] : memref<8x32xf32, #tpu.memory_space<vmem>>, vector<8x32xf32>
    %c0_1 = arith.constant 0 : index
    %c0_2 = arith.constant 0 : index
    %1 = vector.load %arg2[%c0_1, %c0_2] : memref<32x128xf32, #tpu.memory_space<vmem>>, vector<32x128xf32>
    %cst = arith.constant dense<0.000000e+00> : vector<8x128xf32>
    %2 = tpu.matmul %0, %1, %cst {dimension_numbers = #tpu.dot_dimension_numbers<[1], [0], [0], [1], [0, 0, 1, 1], [], []>} : vector<8x32xf32>, vector<32x128xf32>, vector<8x128xf32> -> vector<8x128xf32>
    %c0_3 = arith.constant 0 : index
    %c0_4 = arith.constant 0 : index
    %3 = vector.load %arg3[%c0_3, %c0_4] : memref<1x128xf32, #tpu.memory_space<vmem>>, vector<1x128xf32>
    %4 = vector.broadcast %3 : vector<1x128xf32> to vector<8x128xf32>
    %5 = arith.addf %2, %4 : vector<8x128xf32>
    %c0_5 = arith.constant 0 : index
    %c0_6 = arith.constant 0 : index
    %6 = vector.load %arg7[%c0_5, %c0_6] : memref<8x128xf32, #tpu.memory_space<vmem>>, vector<8x128xf32>
    tpu.vector_store %arg7[%c0_5, %c0_6], %5 {strides = array<i32>} : memref<8x128xf32, #tpu.memory_space<vmem>>, vector<8x128xf32>,
    %7 = arith.mulf %5, %5 : vector<8x128xf32>
    %cst_7 = arith.constant dense<0.000000e+00> : vector<8xf32>
    %8 = vector.multi_reduction <add>, %7, %cst_7 [1] : vector<8x128xf32> to vector<8xf32>
    %9 = vector.shape_cast %8 : vector<8xf32> to vector<8x1xf32>
    %c0_8 = arith.constant 0 : index
    %c0_9 = arith.constant 0 : index
    %10 = vector.load %arg4[%c0_8, %c0_9] : memref<128x128xf32, #tpu.memory_space<vmem>>, vector<128x128xf32>
    %cst_10 = arith.constant dense<0.000000e+00> : vector<8x128xf32>
    %11 = tpu.matmul %5, %10, %cst_10 {dimension_numbers = #tpu.dot_dimension_numbers<[1], [0], [0], [1], [0, 0, 1, 1], [], []>} : vector<8x128xf32>, vector<128x128xf32>, vector<8x128xf32> -> vector<8x128xf32>
    %c0_11 = arith.constant 0 : index
    %c0_12 = arith.constant 0 : index
    %12 = vector.load %arg5[%c0_11, %c0_12] : memref<1x128xf32, #tpu.memory_space<vmem>>, vector<1x128xf32>
    %13 = vector.broadcast %9 : vector<8x1xf32> to vector<8x128xf32>
    %14 = vector.broadcast %12 : vector<1x128xf32> to vector<8x128xf32>
    %15 = arith.addf %13, %14 : vector<8x128xf32>
    %16 = arith.addf %15, %11 : vector<8x128xf32>
    %cst_13 = arith.constant 0.000000e+00 : f32
    %17 = vector.broadcast %cst_13 : f32 to vector<8x128xf32>
    %18 = arith.maximumf %16, %17 : vector<8x128xf32>
    %cst_14 = arith.constant 1.000000e+00 : f32
    %19 = vector.broadcast %cst_14 : f32 to vector<8x128xf32>
    %20 = arith.addf %19, %18 : vector<8x128xf32>
    %21 = tpu.reciprocal %20 {approx = true} : vector<8x128xf32> -> vector<8x128xf32>
    %22 = arith.mulf %20, %21 : vector<8x128xf32>
    %cst_15 = arith.constant 2.000000e+00 : f32
    %23 = vector.broadcast %cst_15 : f32 to vector<8x128xf32>
    %24 = arith.subf %23, %22 : vector<8x128xf32>
    %25 = arith.mulf %21, %24 : vector<8x128xf32>
    %26 = tpu.iota {dimensions = array<i32: 1>} : vector<8x128xi32>
    %c4_i32 = arith.constant 4 : i32
    %27 = vector.broadcast %c4_i32 : i32 to vector<8x128xi32>
    %28 = arith.cmpi slt, %26, %27 : vector<8x128xi32>
    %cst_16 = arith.constant 0.000000e+00 : f32
    %29 = vector.broadcast %cst_16 : f32 to vector<8x128xf32>
    %30 = arith.select %28, %25, %29 : vector<8x128xi1>, vector<8x128xf32>
    %cst_17 = arith.constant dense<0.000000e+00> : vector<8xf32>
    %31 = vector.multi_reduction <add>, %30, %cst_17 [1] : vector<8x128xf32> to vector<8xf32>
    %32 = vector.shape_cast %31 : vector<8xf32> to vector<8x1xf32>
    %33 = tpu.reciprocal %32 : vector<8x1xf32> -> vector<8x1xf32>
    %34 = vector.broadcast %33 : vector<8x1xf32> to vector<8x128xf32>
    %35 = arith.mulf %30, %34 : vector<8x128xf32>
    %c0_18 = arith.constant 0 : index
    %c0_19 = arith.constant 0 : index
    %36 = vector.load %arg6[%c0_18, %c0_19] : memref<8x128xf32, #tpu.memory_space<vmem>>, vector<8x128xf32>
    tpu.vector_store %arg6[%c0_18, %c0_19], %35 {strides = array<i32>} : memref<8x128xf32, #tpu.memory_space<vmem>>, vector<8x128xf32>,
    return
  }
  func.func @transform_0(%arg0: i32) -> (i32, i32) {
    %c0_i32 = arith.constant 0 : i32
    %c0_i32_0 = arith.constant 0 : i32
    return %arg0, %c0_i32 : i32, i32
  }
  func.func @transform_1(%arg0: i32) -> (i32, i32) {
    %c0_i32 = arith.constant 0 : i32
    %c0_i32_0 = arith.constant 0 : i32
    %c0_i32_1 = arith.constant 0 : i32
    return %c0_i32, %c0_i32_0 : i32, i32
  }
  func.func @transform_2(%arg0: i32) -> (i32, i32) {
    %c0_i32 = arith.constant 0 : i32
    %c0_i32_0 = arith.constant 0 : i32
    %c0_i32_1 = arith.constant 0 : i32
    return %c0_i32, %c0_i32_0 : i32, i32
  }
  func.func @transform_3(%arg0: i32) -> (i32, i32) {
    %c0_i32 = arith.constant 0 : i32
    %c0_i32_0 = arith.constant 0 : i32
    %c0_i32_1 = arith.constant 0 : i32
    return %c0_i32, %c0_i32_0 : i32, i32
  }
  func.func @transform_4(%arg0: i32) -> (i32, i32) {
    %c0_i32 = arith.constant 0 : i32
    %c0_i32_0 = arith.constant 0 : i32
    %c0_i32_1 = arith.constant 0 : i32
    return %c0_i32, %c0_i32_0 : i32, i32
  }
  func.func @transform_5(%arg0: i32) -> (i32, i32) {
    %c0_i32 = arith.constant 0 : i32
    %c0_i32_0 = arith.constant 0 : i32
    return %arg0, %c0_i32 : i32, i32
  }
  func.func @transform_6(%arg0: i32) -> (i32, i32) {
    %c0_i32 = arith.constant 0 : i32
    %c0_i32_0 = arith.constant 0 : i32
    return %arg0, %c0_i32 : i32, i32
  }
}

</mosaic_0001>

<llo_original>
// kernel: tpu_custom_call.1
$region0: #{tpu_custom_call.1}
  #allocation0 [shape = 'u32[]', space=smem, size = 0x4, offset = 0x4, fixed_abs, tag = 'smem constant byte address 0x4 - core index']
  #allocation1 [shape = 'u32[144,128]{1,0:T(1,128)}', space=vmem, size = 0x12000, scoped, tag = 'internal scratch']
  %s0 = inlined_call_operand.hbm [shape: f32[8,32], index: 0, kind: input, shape index: {}]
  %s1 = inlined_call_operand.hbm [shape: f32[32,128], index: 1, kind: input, shape index: {}]
  %s2 = inlined_call_operand.vmem [shape: f32[1,128], index: 2, kind: input, shape index: {}]
  %s3 = inlined_call_operand.hbm [shape: f32[128,128], index: 3, kind: input, shape index: {}]
  %s4 = inlined_call_operand.vmem [shape: f32[1,128], index: 4, kind: input, shape index: {}]
  %s5 = inlined_call_operand.hbm [shape: f32[8,128], index: 5, kind: output, shape index: {0}]
  %s6 = inlined_call_operand.hbm [shape: f32[8,128], index: 6, kind: output, shape index: {1}]
  %7 = xla_tuple %s5, %s6
  %s8 = sld [smem:[#allocation0]]
  $region50: #{tpu_custom_call.1} parent=0
    _
  %s10 = ssub.s32 1, %s8
  %s11 = scalar_select 0, %s10, %s8
  $region1: #{tpu_custom_call.1} parent=0
    #allocation2 [shape = 'u8[4096]{0}', space=vmem, size = 0x1000, scoped, tag = 'input window, operand 0, single buffered']
    #allocation3 [shape = 's32[1]{0}', space=sflag, size = 0x4, scoped, tag = 'scoped memory for tpu_custom_call.1']
    #allocation4 [shape = 's32[1]{0}', space=sflag, size = 0x4, scoped, tag = 'scoped memory for tpu_custom_call.1']
    #allocation5 [shape = 'u8[16384]{0}', space=vmem, size = 0x4000, scoped, tag = 'input window, operand 1, single buffered']
    #allocation6 [shape = 's32[1]{0}', space=sflag, size = 0x4, scoped, tag = 'scoped memory for tpu_custom_call.1']
    #allocation7 [shape = 'u8[65536]{0}', space=vmem, size = 0x10000, scoped, tag = 'input window, operand 3, single buffered']
    #allocation8 [shape = 'u8[4096]{0}', space=vmem, size = 0x1000, scoped, tag = 'output window, operand 0, single buffered']
    #allocation9 [shape = 'u8[4096]{0}', space=vmem, size = 0x1000, scoped, tag = 'output window, operand 1, single buffered']
    #allocation10 [shape = 's32[1]{0}', space=sflag, size = 0x4, scoped, tag = 'scoped memory for tpu_custom_call.1']
    %12 = vsyncpa [#allocation3], 0
    %13 = vsyncpa [#allocation6], 0
    %14 = vsyncpa [#allocation4], 0
    %15 = vsyncpa [#allocation10], 0
    // Predicated region
    $region2: #{tpu_custom_call.1} parent=1 // pred_check
      _
    $region3: #{tpu_custom_call.1} parent=1 // pred_check_branch
      %17 = sbr.rel (0) target = $region5
    $region4: #{tpu_custom_call.1} parent=1 // pred_region
      %s19 = ssub.s32 128, 128
      %20 = vsyncadd [#allocation3], %s19
      %s22 = sshll.u32 [#allocation2], 4
      %s23 = int_to_ptr.vmem [resolvable:$true] %s22
      %25 = dma.hbm_to_vmem [thread:$0]  %s0, 128, %s23, [#allocation3]
    $region5: #{tpu_custom_call.1} parent=1 // pred_fallthru
      _
    // Predicated region
    $region6: #{tpu_custom_call.1} parent=1 // pred_check
      _
    $region7: #{tpu_custom_call.1} parent=1 // pred_check_branch
      %27 = sbr.rel (0) target = $region9
    $region8: #{tpu_custom_call.1} parent=1 // pred_region
      %s29 = ssub.s32 512, 512
      %30 = vsyncadd [#allocation6], %s29
      %s31 = sshll.u32 [#allocation5], 4
      %s32 = int_to_ptr.vmem [resolvable:$true] %s31
      %37 = dma.hbm_to_vmem [thread:$0]  %s1, 512, %s32, [#allocation6], 128, 128, 8
    $region9: #{tpu_custom_call.1} parent=1 // pred_fallthru
      _
    // Predicated region
    $region10: #{tpu_custom_call.1} parent=1 // pred_check
      _
    $region11: #{tpu_custom_call.1} parent=1 // pred_check_branch
      %39 = sbr.rel (0) target = $region13
    $region12: #{tpu_custom_call.1} parent=1 // pred_region
      _
    $region13: #{tpu_custom_call.1} parent=1 // pred_fallthru
      _
    // Predicated region
    $region14: #{tpu_custom_call.1} parent=1 // pred_check
      _
    $region15: #{tpu_custom_call.1} parent=1 // pred_check_branch
      %41 = sbr.rel (0) target = $region17
    $region16: #{tpu_custom_call.1} parent=1 // pred_region
      %s43 = ssub.s32 2048, 2048
      %44 = vsyncadd [#allocation6], %s43
      %s45 = sshll.u32 [#allocation7], 4
      %s46 = int_to_ptr.vmem [resolvable:$true] %s45
      %51 = dma.hbm_to_vmem [thread:$0]  %s3, 2048, %s46, [#allocation6], 128, 128, 8
    $region17: #{tpu_custom_call.1} parent=1 // pred_fallthru
      _
    // Predicated region
    $region18: #{tpu_custom_call.1} parent=1 // pred_check
      _
    $region19: #{tpu_custom_call.1} parent=1 // pred_check_branch
      %53 = sbr.rel (0) target = $region21
    $region20: #{tpu_custom_call.1} parent=1 // pred_region
      _
    $region21: #{tpu_custom_call.1} parent=1 // pred_fallthru
      _
    // Predicated region
    $region22: #{tpu_custom_call.1} parent=1 // pred_check
      _
    $region23: #{tpu_custom_call.1} parent=1 // pred_check_branch
      %55 = sbr.rel (0) target = $region25
    $region24: #{tpu_custom_call.1} parent=1 // pred_region
      %56 = dma.done [#allocation3], 128
    $region25: #{tpu_custom_call.1} parent=1 // pred_fallthru
      _
    // Predicated region
    $region26: #{tpu_custom_call.1} parent=1 // pred_check
      _
    $region27: #{tpu_custom_call.1} parent=1 // pred_check_branch
      %58 = sbr.rel (0) target = $region29
    $region28: #{tpu_custom_call.1} parent=1 // pred_region
      %59 = dma.done [#allocation6], 512
    $region29: #{tpu_custom_call.1} parent=1 // pred_fallthru
      _
    // Predicated region
    $region30: #{tpu_custom_call.1} parent=1 // pred_check
      _
    $region31: #{tpu_custom_call.1} parent=1 // pred_check_branch
      %61 = sbr.rel (0) target = $region33
    $region32: #{tpu_custom_call.1} parent=1 // pred_region
      %62 = dma.done [#allocation6], 2048
    $region33: #{tpu_custom_call.1} parent=1 // pred_fallthru
      _
    %v63 = vld [vmem:[#allocation2] sm:$0xff]
    %v64 = vld [vmem:[#allocation5] sm:$0xff]
    %v65 = vld [vmem:[#allocation5 + $0x8] sm:$0xff]
    %v66 = vld [vmem:[#allocation5 + $0x10] sm:$0xff]
    %v67 = vld [vmem:[#allocation5 + $0x18] sm:$0xff]
    %v68 = vld [vmem:[%s2] sm:$0x1]
    %v70 = vlaneseq
    %v71 = vshrl.u32 %v70, 7
    %v72 = vsub.s32 0, %v71
    %v73 = vrot.slane %v68, %v72
    %vm75 = vcmask 261120
    %v77 = vsel %vm75, %v63, 0
    %79 = vmatprep.subr.mxu0 0.0
    %80 = vmatpush1.msra.mxu0 %v64
    %81 = vmatprep.subr.mxu0 0.0
    %82 = vmatpush1.msra.mxu0 %v65
    %83 = vmatprep.subr.mxu0 0.0
    %84 = vmatpush1.msra.mxu0 %v66
    %85 = vmatprep.subr.mxu0 0.0
    %86 = vmatpush1.msra.mxu0 %v67
    %87 = vmatprep.subr.mxu0 0.0
    %88 = vmatpush1.msra.mxu0 0.0
    %89 = vmatprep.subr.mxu0 0.0
    %90 = vmatpush1.msra.mxu0 0.0
    %91 = vmatprep.subr.mxu0 0.0
    %92 = vmatpush1.msra.mxu0 0.0
    %93 = vmatprep.subr.mxu0 0.0
    %94 = vmatpush1.msra.mxu0 0.0
    %95 = vmatprep.subr.mxu0 0.0
    %96 = vmatpush1.msra.mxu0 0.0
    %97 = vmatprep.subr.mxu0 0.0
    %98 = vmatpush1.msra.mxu0 0.0
    %99 = vmatprep.subr.mxu0 0.0
    %100 = vmatpush1.msra.mxu0 0.0
    %101 = vmatprep.subr.mxu0 0.0
    %102 = vmatpush1.msra.mxu0 0.0
    %103 = vmatprep.subr.mxu0 0.0
    %104 = vmatpush1.msra.mxu0 0.0
    %105 = vmatprep.subr.mxu0 0.0
    %106 = vmatpush1.msra.mxu0 0.0
    %107 = vmatprep.subr.mxu0 0.0
    %108 = vmatpush1.msra.mxu0 0.0
    %109 = vmatprep.subr.mxu0 0.0
    %110 = vmatpush1.msra.mxu0 0.0
    %111 = vmatprep.subr.mxu0 0.0
    %112 = vmatpush1.msra.mxu0 0.0
    %113 = vmatprep.subr.mxu0 0.0
    %114 = vmatpush1.msra.mxu0 0.0
    %115 = vmatprep.subr.mxu0 0.0
    %116 = vmatpush1.msra.mxu0 0.0
    %117 = vmatprep.subr.mxu0 0.0
    %118 = vmatpush1.msra.mxu0 0.0
    %119 = vmatprep.subr.mxu0 0.0
    %120 = vmatpush1.msra.mxu0 0.0
    %121 = vmatprep.subr.mxu0 0.0
    %122 = vmatpush1.msra.mxu0 0.0
    %123 = vmatprep.subr.mxu0 0.0
    %124 = vmatpush1.msra.mxu0 0.0
    %125 = vmatprep.subr.mxu0 0.0
    %126 = vmatpush1.msra.mxu0 0.0
    %127 = vmatprep.subr.mxu0 0.0
    %128 = vmatpush1.msra.mxu0 0.0
    %129 = vmatprep.subr.mxu0 0.0
    %130 = vmatpush1.msra.mxu0 0.0
    %131 = vmatprep.subr.mxu0 0.0
    %132 = vmatpush1.msra.mxu0 0.0
    %133 = vmatprep.subr.mxu0 0.0
    %134 = vmatpush1.msra.mxu0 0.0
    %135 = vmatprep.subr.mxu0 0.0
    %136 = vmatpush1.msra.mxu0 0.0
    %137 = vmatprep.subr.mxu0 0.0
    %138 = vmatpush1.msra.mxu0 0.0
    %139 = vmatprep.subr.mxu0 0.0
    %140 = vmatpush1.msra.mxu0 0.0
    %141 = vmatprep.subr.mxu0 0.0
    %142 = vmatpush1.msra.mxu0 0.0
    %143 = vmatprep.mubr.f32.mxu0 0.0
    %144 = vmatmul.mubr.f32.gmra.mrb[0].mxu0 %v77
    %v145 = vpop.f32.mrb[0].mxu0
    %v146 = vadd.f32 %v73, %v145
    %v147 = vpop.f32.mrb[0].mxu0
    %148 = vdwg.mxu0
    %149 = vst [vmem:[#allocation9] sm:$0xff] %v146
    %v150 = vmul.f32 %v146, %v146
    %151 = vadd.xlane.f32.xlu0 %v150
    %v152 = vpop.xlane.xlu0 %151
    %v153 = vld [vmem:[#allocation7] sm:$0xff]
    %v154 = vld [vmem:[#allocation7 + $0x8] sm:$0xff]
    %v155 = vld [vmem:[#allocation7 + $0x10] sm:$0xff]
    %v156 = vld [vmem:[#allocation7 + $0x18] sm:$0xff]
    %v157 = vld [vmem:[#allocation7 + $0x20] sm:$0xff]
    %v158 = vld [vmem:[#allocation7 + $0x28] sm:$0xff]
    %v159 = vld [vmem:[#allocation7 + $0x30] sm:$0xff]
    %v160 = vld [vmem:[#allocation7 + $0x38] sm:$0xff]
    %v161 = vld [vmem:[#allocation7 + $0x40] sm:$0xff]
    %v162 = vld [vmem:[#allocation7 + $0x48] sm:$0xff]
    %v163 = vld [vmem:[#allocation7 + $0x50] sm:$0xff]
    %v164 = vld [vmem:[#allocation7 + $0x58] sm:$0xff]
    %v165 = vld [vmem:[#allocation7 + $0x60] sm:$0xff]
    %v166 = vld [vmem:[#allocation7 + $0x68] sm:$0xff]
    %v167 = vld [vmem:[#allocation7 + $0x70] sm:$0xff]
    %v168 = vld [vmem:[#allocation7 + $0x78] sm:$0xff]
    %169 = vmatprep.subr.mxu0 0.0
    %170 = vmatpush1.msra.mxu0 %v153
    %171 = vmatprep.subr.mxu0 0.0
    %172 = vmatpush1.msra.mxu0 %v154
    %173 = vmatprep.subr.mxu0 0.0
    %174 = vmatpush1.msra.mxu0 %v155
    %175 = vmatprep.subr.mxu0 0.0
    %176 = vmatpush1.msra.mxu0 %v156
    %177 = vmatprep.subr.mxu0 0.0
    %178 = vmatpush1.msra.mxu0 %v157
    %179 = vmatprep.subr.mxu0 0.0
    %180 = vmatpush1.msra.mxu0 %v158
    %181 = vmatprep.subr.mxu0 0.0
    %182 = vmatpush1.msra.mxu0 %v159
    %183 = vmatprep.subr.mxu0 0.0
    %184 = vmatpush1.msra.mxu0 %v160
    %185 = vmatprep.subr.mxu0 0.0
    %186 = vmatpush1.msra.mxu0 %v161
    %187 = vmatprep.subr.mxu0 0.0
    %188 = vmatpush1.msra.mxu0 %v162
    %189 = vmatprep.subr.mxu0 0.0
    %190 = vmatpush1.msra.mxu0 %v163
    %191 = vmatprep.subr.mxu0 0.0
    %192 = vmatpush1.msra.mxu0 %v164
    %193 = vmatprep.subr.mxu0 0.0
    %194 = vmatpush1.msra.mxu0 %v165
    %195 = vmatprep.subr.mxu0 0.0
    %196 = vmatpush1.msra.mxu0 %v166
    %197 = vmatprep.subr.mxu0 0.0
    %198 = vmatpush1.msra.mxu0 %v167
    %199 = vmatprep.subr.mxu0 0.0
    %200 = vmatpush1.msra.mxu0 %v168
    %201 = vmatprep.subr.mxu0 0.0
    %202 = vmatpush1.msra.mxu0 0.0
    %203 = vmatprep.subr.mxu0 0.0
    %204 = vmatpush1.msra.mxu0 0.0
    %205 = vmatprep.subr.mxu0 0.0
    %206 = vmatpush1.msra.mxu0 0.0
    %207 = vmatprep.subr.mxu0 0.0
    %208 = vmatpush1.msra.mxu0 0.0
    %209 = vmatprep.subr.mxu0 0.0
    %210 = vmatpush1.msra.mxu0 0.0
    %211 = vmatprep.subr.mxu0 0.0
    %212 = vmatpush1.msra.mxu0 0.0
    %213 = vmatprep.subr.mxu0 0.0
    %214 = vmatpush1.msra.mxu0 0.0
    %215 = vmatprep.subr.mxu0 0.0
    %216 = vmatpush1.msra.mxu0 0.0
    %217 = vmatprep.subr.mxu0 0.0
    %218 = vmatpush1.msra.mxu0 0.0
    %219 = vmatprep.subr.mxu0 0.0
    %220 = vmatpush1.msra.mxu0 0.0
    %221 = vmatprep.subr.mxu0 0.0
    %222 = vmatpush1.msra.mxu0 0.0
    %223 = vmatprep.subr.mxu0 0.0
    %224 = vmatpush1.msra.mxu0 0.0
    %225 = vmatprep.subr.mxu0 0.0
    %226 = vmatpush1.msra.mxu0 0.0
    %227 = vmatprep.subr.mxu0 0.0
    %228 = vmatpush1.msra.mxu0 0.0
    %229 = vmatprep.subr.mxu0 0.0
    %230 = vmatpush1.msra.mxu0 0.0
    %231 = vmatprep.subr.mxu0 0.0
    %232 = vmatpush1.msra.mxu0 0.0
    %233 = vmatprep.mubr.f32.mxu0 0.0
    %234 = vmatmul.mubr.f32.gmra.mrb[0].mxu0 %v146
    %v235 = vpop.f32.mrb[0].mxu0
    %v236 = vadd.f32 0.0, %v235
    %v237 = vpop.f32.mrb[0].mxu0
    %238 = vdwg.mxu0
    %v239 = vld [vmem:[%s4] sm:$0x1]
    %v241 = vlaneseq
    %v242 = vshrl.u32 %v241, 7
    %v243 = vsub.s32 0, %v242
    %v244 = vrot.slane %v239, %v243
    %v246 = vadd.f32 %v152, %v244
    %v247 = vadd.f32 %v246, %v236
    %v248 = vmax.f32 %v247, 0.0
    %v249 = vadd.f32 %v248, 1.0
    %v250 = vrcp.pop %v249
    %v251 = vmul.f32 %v249, %v250
    %v252 = vsub.f32 2.0, %v251
    %v253 = vmul.f32 %v250, %v252
    %v254 = vlaneseq
    %v255 = vand.u32 %v254, 127
    %vm256 = vcmp.lt.s32.totalorder %v255, 4
    %v257 = vsel %vm256, %v253, 0.0
    %258 = vadd.xlane.f32.xlu0 %v257
    %v259 = vpop.xlane.xlu0 %258
    %v260 = vrcp.pop %v259
    %v261 = vmul.f32 %v257, %v260
    %262 = vst [vmem:[#allocation8] sm:$0xff] %v261
    // Predicated region
    $region34: #{tpu_custom_call.1} parent=1 // pred_check
      _
    $region35: #{tpu_custom_call.1} parent=1 // pred_check_branch
      %264 = sbr.rel (0) target = $region37
    $region36: #{tpu_custom_call.1} parent=1 // pred_region
      %s266 = ssub.s32 128, 128
      %267 = vsyncadd [#allocation4], %s266
      %s269 = sshll.u32 [#allocation8], 4
      %s270 = int_to_ptr.vmem [resolvable:$true] %s269
      %272 = dma.vmem_to_hbm [thread:$0]  %s270, 128, %s5, [#allocation4]
    $region37: #{tpu_custom_call.1} parent=1 // pred_fallthru
      _
    // Predicated region
    $region38: #{tpu_custom_call.1} parent=1 // pred_check
      _
    $region39: #{tpu_custom_call.1} parent=1 // pred_check_branch
      %274 = sbr.rel (0) target = $region41
    $region40: #{tpu_custom_call.1} parent=1 // pred_region
      %s276 = ssub.s32 128, 128
      %277 = vsyncadd [#allocation10], %s276
      %s279 = sshll.u32 [#allocation9], 4
      %s280 = int_to_ptr.vmem [resolvable:$true] %s279
      %282 = dma.vmem_to_hbm [thread:$0]  %s280, 128, %s6, [#allocation10]
    $region41: #{tpu_custom_call.1} parent=1 // pred_fallthru
      _
    // Predicated region
    $region42: #{tpu_custom_call.1} parent=1 // pred_check
      _
    $region43: #{tpu_custom_call.1} parent=1 // pred_check_branch
      %284 = sbr.rel (0) target = $region45
    $region44: #{tpu_custom_call.1} parent=1 // pred_region
      %285 = dma.done [#allocation4], 128
    $region45: #{tpu_custom_call.1} parent=1 // pred_fallthru
      _
    // Predicated region
    $region46: #{tpu_custom_call.1} parent=1 // pred_check
      _
    $region47: #{tpu_custom_call.1} parent=1 // pred_check_branch
      %287 = sbr.rel (0) target = $region49
    $region48: #{tpu_custom_call.1} parent=1 // pred_region
      %288 = dma.done [#allocation10], 128
    $region49: #{tpu_custom_call.1} parent=1 // pred_fallthru
      _
    %289 = vsyncpa [#allocation3], 1
    %290 = vsyncpa [#allocation6], 1
    %291 = vsyncpa [#allocation4], 1
    %292 = vsyncpa [#allocation10], 1

</llo_original>
